<compile_context>
chip_gen: v7x
topology: tpu7x:2x2x1
jax: 0.10.0
libtpu: 0.0.40
codegen_flags: <defaults>
</compile_context>

<pallas_src>
import numpy as np
import jax
import jax.numpy as jnp
from jax import lax
from jax.experimental import pallas as pl
from jax.experimental.pallas import tpu as pltpu

# Problem sizes (DecoderS(in_channels=4, out_channels=1), small test shapes).
N, C_IN, H, W = 2, 4, 16, 16
C_MID, C_OUT = C_IN // 2, 1
H2, W2 = 2 * H, 2 * W
BN_EPS = 1e-5

ROWS_X = N * H           # 32  kernel-input rows  (n, h)
COLS_X = C_IN * W        # 64  kernel-input cols  (ci, w)
ROWS_Y = N * H2          # 64  output rows        (n, p)
COLS_MID = C_MID * W2    # 64  hidden cols        (co, q)
COLS_OUT = C_OUT * W2    # 32  real output cols   (o, q)
LANES = 128              # padded lane width of constant slab / output slab

# Packed constant-slab row offsets (16-row aligned for bf16 sublane packing).
P_OFF = 0                # rows [  0, 64) : P_pad  (COLS_MID, LANES), real cols [0, COLS_OUT)
M_OFF = 64               # rows [ 64,256) : M[dy]  (COLS_X, COLS_MID), one 64-row block per dy
A_OFF = 256              # rows [256,448) : A[dy]  (ROWS_Y, ROWS_X),  one 64-row block per dy
B1_ROW = 448             # row 448        : bias1 row (first COLS_OUT lanes)
B3_ROW = 464             # row 464        : bias3 row (first COLS_MID lanes)
SLAB_ROWS = 480


def _bilinear_matrix(in_size, out_size):
    """(out, in) interpolation matrix matching nn.Upsample(bilinear, align_corners=False)."""
    A = np.zeros((out_size, in_size), np.float32)
    scale = in_size / out_size
    for o in range(out_size):
        src = (o + 0.5) * scale - 0.5
        if src < 0.0:
            src = 0.0
        i0 = min(int(np.floor(src)), in_size - 1)
        i1 = min(i0 + 1, in_size - 1)
        lam = src - i0
        A[o, i0] += 1.0 - lam
        A[o, i1] += lam
    return A


def _shift_matrix(n, d):
    """(n, n) matrix S with S[r, r+d] = 1 (zero-padded shift, for SAME-padding taps)."""
    S = np.zeros((n, n), np.float32)
    for r in range(n):
        c = r + d
        if 0 <= c < n:
            S[r, c] = 1.0
    return S


def decoder_s_kernel(x_ref, c_ref, out_ref):
    f32 = jnp.float32
    x2 = x_ref[...]                                                       # (32, 64) bf16

    # Stages A+B:  y[(n,p),(co,q)] = sum_dy  A[dy] @ (x2 @ M[dy])
    # dy reduction as a single MXU accumulation chain (kept in MRB on v7x).
    y = None
    for dy in range(3):
        m = c_ref[M_OFF + dy * 64:M_OFF + (dy + 1) * 64, 0:COLS_MID]      # (64, 64) bf16
        a = c_ref[A_OFF + dy * 64:A_OFF + (dy + 1) * 64, 0:ROWS_X]        # (64, 32) bf16
        v = jnp.dot(x2, m, preferred_element_type=f32)                    # (32, 64) f32
        t = jnp.dot(a, v.astype(jnp.bfloat16), preferred_element_type=f32)  # (64, 64) f32
        y = t if y is None else y + t

    # Folded BatchNorm (eval) bias + ReLU in f32.
    bias3 = c_ref[B3_ROW:B3_ROW + 1, 0:COLS_MID].astype(f32)              # (1, 64)
    h = jnp.maximum(y + bias3, 0.0)

    # Stage 3: 1x1 conv as one matmul into a 128-lane-dense padded output slab.
    p = c_ref[P_OFF:P_OFF + COLS_MID, :]                                  # (64, 128) bf16
    bias1 = c_ref[B1_ROW:B1_ROW + 1, :].astype(f32)                       # (1, 128)
    out_ref[...] = jnp.dot(h.astype(jnp.bfloat16), p,
                           preferred_element_type=f32) + bias1


def build_decoder_s_constants(params):
    """Host-side, one-time construction of the packed bf16 constant slab (param-only)."""
    w3, b3, gamma, beta, rmean, rvar, w1, b1 = [np.asarray(p, np.float32) for p in params]

    a_h = _bilinear_matrix(H, H2)                                            # (H2, H)
    a_w = _bilinear_matrix(W, W2)                                            # (W2, W)
    ahs = np.stack([_shift_matrix(H2, dy - 1) @ a_h for dy in range(3)])     # (3, H2, H)
    awt = np.stack([a_w.T @ _shift_matrix(W2, dx - 1).T for dx in range(3)]) # (3, W, W2)

    # Fold BN (eval) scale into the 3x3 weights; keep bias as a per-(co,q) row.
    scale = gamma / np.sqrt(rvar + BN_EPS)
    bias3 = (b3 - rmean) * scale + beta
    w3f = w3 * scale[:, None, None, None]                                    # (C_MID, C_IN, 3, 3)

    # M[dy][(ci,w),(co,q)] = sum_dx w3f[co,ci,dy,dx] * AWT[dx][w,q]   (n-shared)
    m = np.einsum('oiyx,xwq->yiwoq', w3f, awt).reshape(3, COLS_X, COLS_MID)
    # A[dy][(n,p),(n',h)] = delta(n,n') * AHs[dy][p,h]  (tiny block-diag on the left operand)
    eye_n = np.eye(N, dtype=np.float32)
    a_blk = np.stack([np.kron(eye_n, ahs[dy]) for dy in range(3)])           # (3, 64, 32)
    # P[(co,q'),(o,q)] = w1[o,co] * delta(q',q)
    p_blk = np.kron(w1[:, :, 0, 0].T, np.eye(W2, dtype=np.float32))          # (64, 32)

    slab = np.zeros((SLAB_ROWS, LANES), np.float32)
    slab[P_OFF:P_OFF + COLS_MID, 0:COLS_OUT] = p_blk
    for dy in range(3):
        slab[M_OFF + dy * 64:M_OFF + (dy + 1) * 64, 0:COLS_MID] = m[dy]
        slab[A_OFF + dy * 64:A_OFF + (dy + 1) * 64, 0:ROWS_X] = a_blk[dy]
    slab[B1_ROW, 0:COLS_OUT] = np.repeat(b1, W2)
    slab[B3_ROW, 0:COLS_MID] = np.repeat(bias3, W2)
    return jnp.asarray(slab, jnp.bfloat16)


def make_decoder_s(params):
    """Builds constants once; returns a jitted forward(x) that only does layout + 1 pallas_call."""
    consts = build_decoder_s_constants(params)

    call = pl.pallas_call(
        decoder_s_kernel,
        out_shape=jax.ShapeDtypeStruct((ROWS_Y, LANES), jnp.float32),
        in_specs=[pl.BlockSpec(memory_space=pltpu.MemorySpace.VMEM),
                  pl.BlockSpec(memory_space=pltpu.MemorySpace.VMEM)],
        out_specs=pl.BlockSpec(memory_space=pltpu.MemorySpace.VMEM),
    )

    @jax.jit
    def forward(x):
        # Present x as (N*H, C_IN*W) = (32, 64): layout plumbing only.
        x2 = jnp.transpose(x, (0, 2, 1, 3)).reshape(ROWS_X, COLS_X).astype(jnp.bfloat16)
        out_slab = call(x2, consts)                                          # (64, 128) f32
        # (N*H2, 128) -> slice real (o,q) cols -> (N, C_OUT, H2, W2)
        return out_slab[:, :COLS_OUT].reshape(N, H2, C_OUT, W2).transpose(0, 2, 1, 3)

    return forward


def decoder_s_reference(x, params):
    """Pure-JAX reference (same math, XLA ops) for validation."""
    w3, b3, gamma, beta, rmean, rvar, w1, b1 = params
    a_h = jnp.asarray(_bilinear_matrix(H, H2))
    a_w = jnp.asarray(_bilinear_matrix(W, W2))
    u = jnp.einsum('nchw,ph,qw->ncpq', x, a_h, a_w)
    y = lax.conv_general_dilated(u, w3, (1, 1), 'SAME',
                                 dimension_numbers=('NCHW', 'OIHW', 'NCHW'))
    y = y + b3[None, :, None, None]
    y = (y - rmean[None, :, None, None]) / jnp.sqrt(rvar[None, :, None, None] + BN_EPS)
    y = y * gamma[None, :, None, None] + beta[None, :, None, None]
    y = jnp.maximum(y, 0.0)
    z = jnp.einsum('oc,nchw->nohw', w1[:, :, 0, 0], y) + b1[None, :, None, None]
    return z


if __name__ == "__main__":
    key = jax.random.PRNGKey(0)
    ks = jax.random.split(key, 8)
    x = jax.random.normal(ks[0], (N, C_IN, H, W), jnp.float32)

    # Deterministic synthetic parameters (shapes from DecoderS.__init__).
    w3 = 0.2 * jax.random.normal(ks[1], (C_MID, C_IN, 3, 3), jnp.float32)
    b3 = 0.1 * jax.random.normal(ks[2], (C_MID,), jnp.float32)
    gamma = 1.0 + 0.1 * jax.random.normal(ks[3], (C_MID,), jnp.float32)
    beta = 0.1 * jax.random.normal(ks[4], (C_MID,), jnp.float32)
    rmean = 0.1 * jax.random.normal(ks[5], (C_MID,), jnp.float32)
    rvar = 0.5 + jax.random.uniform(ks[6], (C_MID,), jnp.float32)
    w1 = 0.2 * jax.random.normal(ks[7], (C_OUT, C_MID, 1, 1), jnp.float32)
    b1 = 0.1 * jnp.ones((C_OUT,), jnp.float32)
    params = (w3, b3, gamma, beta, rmean, rvar, w1, b1)

    decoder = make_decoder_s(params)          # constants built exactly once, here
    out = decoder(x)
    out = jax.block_until_ready(out)
    assert out.shape == (N, C_OUT, H2, W2)

    ref = decoder_s_reference(x, params)
    np.testing.assert_allclose(np.asarray(out), np.asarray(ref), atol=2e-2, rtol=2e-2)
    print("KERNEL_OK")
</pallas_src>

<mosaic_0001>
module attributes {stable_mosaic.version = 11 : i64} {
  func.func @decoder_s_kernel(%arg0: memref<32x64xbf16, #tpu.memory_space<vmem>>, %arg1: memref<480x128xbf16, #tpu.memory_space<vmem>>, %arg2: memref<64x128xf32, #tpu.memory_space<vmem>>) attributes {dimension_semantics = [], scalar_prefetch = 0 : i64, scratch_operands = 0 : i64, tpu.core_type = #tpu.core_type<tc>} {
    %c0 = arith.constant 0 : index
    %c0_0 = arith.constant 0 : index
    %0 = vector.load %arg0[%c0, %c0_0] : memref<32x64xbf16, #tpu.memory_space<vmem>>, vector<32x64xbf16>
    %c64 = arith.constant 64 : index
    %c0_1 = arith.constant 0 : index
    %1 = vector.load %arg1[%c64, %c0_1] : memref<480x128xbf16, #tpu.memory_space<vmem>>, vector<64x64xbf16>
    %c256 = arith.constant 256 : index
    %c0_2 = arith.constant 0 : index
    %2 = vector.load %arg1[%c256, %c0_2] : memref<480x128xbf16, #tpu.memory_space<vmem>>, vector<64x32xbf16>
    %cst = arith.constant dense<0.000000e+00> : vector<32x64xf32>
    %3 = tpu.matmul %0, %1, %cst {dimension_numbers = #tpu.dot_dimension_numbers<[1], [0], [0], [1], [0, 0, 1, 1], [], []>} : vector<32x64xbf16>, vector<64x64xbf16>, vector<32x64xf32> -> vector<32x64xf32>
    %4 = arith.truncf %3 : vector<32x64xf32> to vector<32x64xbf16>
    %cst_3 = arith.constant dense<0.000000e+00> : vector<64x64xf32>
    %5 = tpu.matmul %2, %4, %cst_3 {dimension_numbers = #tpu.dot_dimension_numbers<[1], [0], [0], [1], [0, 0, 1, 1], [], []>} : vector<64x32xbf16>, vector<32x64xbf16>, vector<64x64xf32> -> vector<64x64xf32>
    %c128 = arith.constant 128 : index
    %c0_4 = arith.constant 0 : index
    %6 = vector.load %arg1[%c128, %c0_4] : memref<480x128xbf16, #tpu.memory_space<vmem>>, vector<64x64xbf16>
    %c320 = arith.constant 320 : index
    %c0_5 = arith.constant 0 : index
    %7 = vector.load %arg1[%c320, %c0_5] : memref<480x128xbf16, #tpu.memory_space<vmem>>, vector<64x32xbf16>
    %cst_6 = arith.constant dense<0.000000e+00> : vector<32x64xf32>
    %8 = tpu.matmul %0, %6, %cst_6 {dimension_numbers = #tpu.dot_dimension_numbers<[1], [0], [0], [1], [0, 0, 1, 1], [], []>} : vector<32x64xbf16>, vector<64x64xbf16>, vector<32x64xf32> -> vector<32x64xf32>
    %9 = arith.truncf %8 : vector<32x64xf32> to vector<32x64xbf16>
    %cst_7 = arith.constant dense<0.000000e+00> : vector<64x64xf32>
    %10 = tpu.matmul %7, %9, %cst_7 {dimension_numbers = #tpu.dot_dimension_numbers<[1], [0], [0], [1], [0, 0, 1, 1], [], []>} : vector<64x32xbf16>, vector<32x64xbf16>, vector<64x64xf32> -> vector<64x64xf32>
    %11 = arith.addf %5, %10 : vector<64x64xf32>
    %c192 = arith.constant 192 : index
    %c0_8 = arith.constant 0 : index
    %12 = vector.load %arg1[%c192, %c0_8] : memref<480x128xbf16, #tpu.memory_space<vmem>>, vector<64x64xbf16>
    %c384 = arith.constant 384 : index
    %c0_9 = arith.constant 0 : index
    %13 = vector.load %arg1[%c384, %c0_9] : memref<480x128xbf16, #tpu.memory_space<vmem>>, vector<64x32xbf16>
    %cst_10 = arith.constant dense<0.000000e+00> : vector<32x64xf32>
    %14 = tpu.matmul %0, %12, %cst_10 {dimension_numbers = #tpu.dot_dimension_numbers<[1], [0], [0], [1], [0, 0, 1, 1], [], []>} : vector<32x64xbf16>, vector<64x64xbf16>, vector<32x64xf32> -> vector<32x64xf32>
    %15 = arith.truncf %14 : vector<32x64xf32> to vector<32x64xbf16>
    %cst_11 = arith.constant dense<0.000000e+00> : vector<64x64xf32>
    %16 = tpu.matmul %13, %15, %cst_11 {dimension_numbers = #tpu.dot_dimension_numbers<[1], [0], [0], [1], [0, 0, 1, 1], [], []>} : vector<64x32xbf16>, vector<32x64xbf16>, vector<64x64xf32> -> vector<64x64xf32>
    %17 = arith.addf %11, %16 : vector<64x64xf32>
    %c464 = arith.constant 464 : index
    %c0_12 = arith.constant 0 : index
    %18 = vector.load %arg1[%c464, %c0_12] : memref<480x128xbf16, #tpu.memory_space<vmem>>, vector<1x64xbf16>
    %19 = arith.extf %18 : vector<1x64xbf16> to vector<1x64xf32>
    %20 = vector.broadcast %19 : vector<1x64xf32> to vector<64x64xf32>
    %21 = arith.addf %17, %20 : vector<64x64xf32>
    %cst_13 = arith.constant 0.000000e+00 : f32
    %22 = vector.broadcast %cst_13 : f32 to vector<64x64xf32>
    %23 = arith.maximumf %21, %22 : vector<64x64xf32>
    %c0_14 = arith.constant 0 : index
    %c0_15 = arith.constant 0 : index
    %24 = vector.load %arg1[%c0_14, %c0_15] : memref<480x128xbf16, #tpu.memory_space<vmem>>, vector<64x128xbf16>
    %c448 = arith.constant 448 : index
    %c0_16 = arith.constant 0 : index
    %25 = vector.load %arg1[%c448, %c0_16] : memref<480x128xbf16, #tpu.memory_space<vmem>>, vector<1x128xbf16>
    %26 = arith.extf %25 : vector<1x128xbf16> to vector<1x128xf32>
    %27 = arith.truncf %23 : vector<64x64xf32> to vector<64x64xbf16>
    %cst_17 = arith.constant dense<0.000000e+00> : vector<64x128xf32>
    %28 = tpu.matmul %27, %24, %cst_17 {dimension_numbers = #tpu.dot_dimension_numbers<[1], [0], [0], [1], [0, 0, 1, 1], [], []>} : vector<64x64xbf16>, vector<64x128xbf16>, vector<64x128xf32> -> vector<64x128xf32>
    %29 = vector.broadcast %26 : vector<1x128xf32> to vector<64x128xf32>
    %30 = arith.addf %28, %29 : vector<64x128xf32>
    %c0_18 = arith.constant 0 : index
    %c0_19 = arith.constant 0 : index
    %31 = vector.load %arg2[%c0_18, %c0_19] : memref<64x128xf32, #tpu.memory_space<vmem>>, vector<64x128xf32>
    tpu.vector_store %arg2[%c0_18, %c0_19], %30 {strides = array<i32>} : memref<64x128xf32, #tpu.memory_space<vmem>>, vector<64x128xf32>,
    return
  }
}

</mosaic_0001>

<llo_original>
// kernel: forward.1
$region0: #{forward.1}
  #allocation0 [shape = 'u32[]', space=smem, size = 0x4, offset = 0x4, fixed_abs, tag = 'smem constant byte address 0x4 - core index']
  #allocation1 [shape = 'u32[144,128]{1,0:T(1,128)}', space=vmem, size = 0x12000, scoped, tag = 'internal scratch']
  %s0 = inlined_call_operand.vmem [shape: bf16[32,64], index: 0, kind: input, shape index: {}]
  %s1 = inlined_call_operand.vmem [shape: bf16[480,128], index: 1, kind: input, shape index: {}]
  %s2 = inlined_call_operand.hbm [shape: f32[64,128], index: 2, kind: output, shape index: {}]
  %s3 = sld [smem:[#allocation0]]
  $region18: #{forward.1} parent=0
    _
  %s5 = ssub.s32 1, %s3
  %s6 = scalar_select 0, %s5, %s3
  $region1: #{forward.1} parent=0
    #allocation2 [shape = 'u8[32768]{0}', space=vmem, size = 0x8000, scoped, tag = 'output window, operand 0, single buffered']
    #allocation3 [shape = 's32[1]{0}', space=sflag, size = 0x4, scoped, tag = 'scoped memory for forward.1']
    %7 = vsyncpa [#allocation3], 0
    // Predicated region
    $region2: #{forward.1} parent=1 // pred_check
      _
    $region3: #{forward.1} parent=1 // pred_check_branch
      %9 = sbr.rel (0) target = $region5
    $region4: #{forward.1} parent=1 // pred_region
      _
    $region5: #{forward.1} parent=1 // pred_fallthru
      _
    // Predicated region
    $region6: #{forward.1} parent=1 // pred_check
      _
    $region7: #{forward.1} parent=1 // pred_check_branch
      %11 = sbr.rel (0) target = $region9
    $region8: #{forward.1} parent=1 // pred_region
      _
    $region9: #{forward.1} parent=1 // pred_fallthru
      _
    %v13 = vld [vmem:[%s0] sm:$0xf]
    %v14 = vld [vmem:[%s0 + $0x4] sm:$0xf]
    %v15 = vld [vmem:[%s0 + $0x8] sm:$0xf]
    %v16 = vld [vmem:[%s0 + $0xc] sm:$0xf]
    %v17 = vld [vmem:[%s1 + $0x20] sm:$0xf]
    %v18 = vld [vmem:[%s1 + $0x24] sm:$0xf]
    %v19 = vld [vmem:[%s1 + $0x28] sm:$0xf]
    %v20 = vld [vmem:[%s1 + $0x2c] sm:$0xf]
    %v21 = vld [vmem:[%s1 + $0x30] sm:$0xf]
    %v22 = vld [vmem:[%s1 + $0x34] sm:$0xf]
    %v23 = vld [vmem:[%s1 + $0x38] sm:$0xf]
    %v24 = vld [vmem:[%s1 + $0x3c] sm:$0xf]
    %v25 = vld [vmem:[%s1 + $0x80] sm:$0xf]
    %v26 = vld [vmem:[%s1 + $0x84] sm:$0xf]
    %v27 = vld [vmem:[%s1 + $0x88] sm:$0xf]
    %v28 = vld [vmem:[%s1 + $0x8c] sm:$0xf]
    %v29 = vld [vmem:[%s1 + $0x90] sm:$0xf]
    %v30 = vld [vmem:[%s1 + $0x94] sm:$0xf]
    %v31 = vld [vmem:[%s1 + $0x98] sm:$0xf]
    %v32 = vld [vmem:[%s1 + $0x9c] sm:$0xf]
    %v37 = vunpack.c.l.b16 %v13
    %v38 = vunpack.c.l.b16 %v14
    %v39 = vunpack.c.l.b16 %v15
    %v40 = vunpack.c.l.b16 %v16
    %v41 = vpack.c.b16 %v38, %v37
    %v42 = vpack.c.b16 %v40, %v39
    %v51 = vunpack.c.l.b16 %v17
    %v52 = vunpack.c.l.b16 %v18
    %v53 = vunpack.c.l.b16 %v19
    %v54 = vunpack.c.l.b16 %v20
    %v55 = vunpack.c.l.b16 %v21
    %v56 = vunpack.c.l.b16 %v22
    %v57 = vunpack.c.l.b16 %v23
    %v58 = vunpack.c.l.b16 %v24
    %v59 = vpack.c.b16 %v52, %v51
    %v60 = vpack.c.b16 %v54, %v53
    %v61 = vpack.c.b16 %v56, %v55
    %v62 = vpack.c.b16 %v58, %v57
    %vm67 = vcmask 523264
    %v69 = vsel %vm67, %v41, 0
    %v72 = vsel %vm67, %v42, 0
    %74 = vmatprep.subr.bf16.mxu0 0
    %75 = vmatpush1.bf16.msra.mxu0 %v59
    %76 = vmatprep.subr.bf16.mxu0 0
    %77 = vmatpush1.bf16.msra.mxu0 %v60
    %78 = vmatprep.subr.bf16.mxu0 0
    %79 = vmatpush1.bf16.msra.mxu0 %v61
    %80 = vmatprep.subr.bf16.mxu0 0
    %81 = vmatpush1.bf16.msra.mxu0 %v62
    %82 = vmatprep.subr.bf16.mxu0 0
    %83 = vmatpush1.bf16.msra.mxu0 0
    %84 = vmatprep.subr.bf16.mxu0 0
    %85 = vmatpush1.bf16.msra.mxu0 0
    %86 = vmatprep.subr.bf16.mxu0 0
    %87 = vmatpush1.bf16.msra.mxu0 0
    %88 = vmatprep.subr.bf16.mxu0 0
    %89 = vmatpush1.bf16.msra.mxu0 0
    %90 = vmatprep.subr.bf16.mxu0 0
    %91 = vmatpush1.bf16.msra.mxu0 0
    %92 = vmatprep.subr.bf16.mxu0 0
    %93 = vmatpush1.bf16.msra.mxu0 0
    %94 = vmatprep.subr.bf16.mxu0 0
    %95 = vmatpush1.bf16.msra.mxu0 0
    %96 = vmatprep.subr.bf16.mxu0 0
    %97 = vmatpush1.bf16.msra.mxu0 0
    %98 = vmatprep.subr.bf16.mxu0 0
    %99 = vmatpush1.bf16.msra.mxu0 0
    %100 = vmatprep.subr.bf16.mxu0 0
    %101 = vmatpush1.bf16.msra.mxu0 0
    %102 = vmatprep.subr.bf16.mxu0 0
    %103 = vmatpush1.bf16.msra.mxu0 0
    %104 = vmatprep.subr.bf16.mxu0 0
    %105 = vmatpush1.bf16.msra.mxu0 0
    %106 = vmatprep.mubr.bf16.mxu0 0
    %107 = vmatmul.mubr.bf16.gmra.mrb[0].mxu0 %v69
    %v108 = vpop.f32.mrb[0].mxu0
    %v109 = vadd.f32 0.0, %v108
    %v110 = vpop.f32.mrb[0].mxu0
    %v111 = vpop.f32.mrb[0].mxu0
    %v112 = vadd.f32 0.0, %v111
    %v113 = vpop.f32.mrb[0].mxu0
    %114 = vmatprep.mubr.bf16.mxu0 0
    %115 = vmatmul.mubr.bf16.gmra.mrb[0].mxu0 %v72
    %v116 = vpop.f32.mrb[0].mxu0
    %v117 = vadd.f32 0.0, %v116
    %v118 = vpop.f32.mrb[0].mxu0
    %v119 = vpop.f32.mrb[0].mxu0
    %v120 = vadd.f32 0.0, %v119
    %v121 = vpop.f32.mrb[0].mxu0
    %122 = vdwg.mxu0
    %v123 = vpack.c.bf16 %v112, %v109
    %v124 = vpack.c.bf16 %v120, %v117
    %v125 = vld [vmem:[%s1 + $0x40] sm:$0xf]
    %v126 = vld [vmem:[%s1 + $0x44] sm:$0xf]
    %v127 = vld [vmem:[%s1 + $0x48] sm:$0xf]
    %v128 = vld [vmem:[%s1 + $0x4c] sm:$0xf]
    %v129 = vld [vmem:[%s1 + $0x50] sm:$0xf]
    %v130 = vld [vmem:[%s1 + $0x54] sm:$0xf]
    %v131 = vld [vmem:[%s1 + $0x58] sm:$0xf]
    %v132 = vld [vmem:[%s1 + $0x5c] sm:$0xf]
    %v133 = vld [vmem:[%s1 + $0xa0] sm:$0xf]
    %v134 = vld [vmem:[%s1 + $0xa4] sm:$0xf]
    %v135 = vld [vmem:[%s1 + $0xa8] sm:$0xf]
    %v136 = vld [vmem:[%s1 + $0xac] sm:$0xf]
    %v137 = vld [vmem:[%s1 + $0xb0] sm:$0xf]
    %v138 = vld [vmem:[%s1 + $0xb4] sm:$0xf]
    %v139 = vld [vmem:[%s1 + $0xb8] sm:$0xf]
    %v140 = vld [vmem:[%s1 + $0xbc] sm:$0xf]
    %v149 = vunpack.c.l.b16 %v125
    %v150 = vunpack.c.l.b16 %v126
    %v151 = vunpack.c.l.b16 %v127
    %v152 = vunpack.c.l.b16 %v128
    %v153 = vunpack.c.l.b16 %v129
    %v154 = vunpack.c.l.b16 %v130
    %v155 = vunpack.c.l.b16 %v131
    %v156 = vunpack.c.l.b16 %v132
    %v157 = vpack.c.b16 %v150, %v149
    %v158 = vpack.c.b16 %v152, %v151
    %v159 = vpack.c.b16 %v154, %v153
    %v160 = vpack.c.b16 %v156, %v155
    %165 = vmatprep.subr.bf16.mxu0 0
    %166 = vmatpush1.bf16.msra.mxu0 %v157
    %167 = vmatprep.subr.bf16.mxu0 0
    %168 = vmatpush1.bf16.msra.mxu0 %v158
    %169 = vmatprep.subr.bf16.mxu0 0
    %170 = vmatpush1.bf16.msra.mxu0 %v159
    %171 = vmatprep.subr.bf16.mxu0 0
    %172 = vmatpush1.bf16.msra.mxu0 %v160
    %173 = vmatprep.subr.bf16.mxu0 0
    %174 = vmatpush1.bf16.msra.mxu0 0
    %175 = vmatprep.subr.bf16.mxu0 0
    %176 = vmatpush1.bf16.msra.mxu0 0
    %177 = vmatprep.subr.bf16.mxu0 0
    %178 = vmatpush1.bf16.msra.mxu0 0
    %179 = vmatprep.subr.bf16.mxu0 0
    %180 = vmatpush1.bf16.msra.mxu0 0
    %181 = vmatprep.subr.bf16.mxu0 0
    %182 = vmatpush1.bf16.msra.mxu0 0
    %183 = vmatprep.subr.bf16.mxu0 0
    %184 = vmatpush1.bf16.msra.mxu0 0
    %185 = vmatprep.subr.bf16.mxu0 0
    %186 = vmatpush1.bf16.msra.mxu0 0
    %187 = vmatprep.subr.bf16.mxu0 0
    %188 = vmatpush1.bf16.msra.mxu0 0
    %189 = vmatprep.subr.bf16.mxu0 0
    %190 = vmatpush1.bf16.msra.mxu0 0
    %191 = vmatprep.subr.bf16.mxu0 0
    %192 = vmatpush1.bf16.msra.mxu0 0
    %193 = vmatprep.subr.bf16.mxu0 0
    %194 = vmatpush1.bf16.msra.mxu0 0
    %195 = vmatprep.subr.bf16.mxu0 0
    %196 = vmatpush1.bf16.msra.mxu0 0
    %197 = vmatprep.mubr.bf16.mxu0 0
    %198 = vmatmul.mubr.bf16.gmra.mrb[0].mxu0 %v69
    %v199 = vpop.f32.mrb[0].mxu0
    %v200 = vadd.f32 0.0, %v199
    %v201 = vpop.f32.mrb[0].mxu0
    %v202 = vpop.f32.mrb[0].mxu0
    %v203 = vadd.f32 0.0, %v202
    %v204 = vpop.f32.mrb[0].mxu0
    %205 = vmatprep.mubr.bf16.mxu0 0
    %206 = vmatmul.mubr.bf16.gmra.mrb[0].mxu0 %v72
    %v207 = vpop.f32.mrb[0].mxu0
    %v208 = vadd.f32 0.0, %v207
    %v209 = vpop.f32.mrb[0].mxu0
    %v210 = vpop.f32.mrb[0].mxu0
    %v211 = vadd.f32 0.0, %v210
    %v212 = vpop.f32.mrb[0].mxu0
    %213 = vdwg.mxu0
    %v214 = vpack.c.bf16 %v203, %v200
    %v215 = vpack.c.bf16 %v211, %v208
    %v224 = vunpack.c.l.b16 %v133
    %v225 = vunpack.c.l.b16 %v134
    %v226 = vunpack.c.l.b16 %v135
    %v227 = vunpack.c.l.b16 %v136
    %v228 = vunpack.c.l.b16 %v137
    %v229 = vunpack.c.l.b16 %v138
    %v230 = vunpack.c.l.b16 %v139
    %v231 = vunpack.c.l.b16 %v140
    %v232 = vpack.c.b16 %v225, %v224
    %v233 = vpack.c.b16 %v227, %v226
    %v234 = vpack.c.b16 %v229, %v228
    %v235 = vpack.c.b16 %v231, %v230
    %vm236 = vcmask 261120
    %v238 = vsel %vm236, %v232, 0
    %v241 = vsel %vm236, %v233, 0
    %v244 = vsel %vm236, %v234, 0
    %v247 = vsel %vm236, %v235, 0
    %249 = vmatprep.subr.bf16.mxu0 0
    %250 = vmatpush1.bf16.msra.mxu0 %v214
    %251 = vmatprep.subr.bf16.mxu0 0
    %252 = vmatpush1.bf16.msra.mxu0 %v215
    %253 = vmatprep.subr.bf16.mxu0 0
    %254 = vmatpush1.bf16.msra.mxu0 0
    %255 = vmatprep.subr.bf16.mxu0 0
    %256 = vmatpush1.bf16.msra.mxu0 0
    %257 = vmatprep.subr.bf16.mxu0 0
    %258 = vmatpush1.bf16.msra.mxu0 0
    %259 = vmatprep.subr.bf16.mxu0 0
    %260 = vmatpush1.bf16.msra.mxu0 0
    %261 = vmatprep.subr.bf16.mxu0 0
    %262 = vmatpush1.bf16.msra.mxu0 0
    %263 = vmatprep.subr.bf16.mxu0 0
    %264 = vmatpush1.bf16.msra.mxu0 0
    %265 = vmatprep.subr.bf16.mxu0 0
    %266 = vmatpush1.bf16.msra.mxu0 0
    %267 = vmatprep.subr.bf16.mxu0 0
    %268 = vmatpush1.bf16.msra.mxu0 0
    %269 = vmatprep.subr.bf16.mxu0 0
    %270 = vmatpush1.bf16.msra.mxu0 0
    %271 = vmatprep.subr.bf16.mxu0 0
    %272 = vmatpush1.bf16.msra.mxu0 0
    %273 = vmatprep.subr.bf16.mxu0 0
    %274 = vmatpush1.bf16.msra.mxu0 0
    %275 = vmatprep.subr.bf16.mxu0 0
    %276 = vmatpush1.bf16.msra.mxu0 0
    %277 = vmatprep.subr.bf16.mxu0 0
    %278 = vmatpush1.bf16.msra.mxu0 0
    %279 = vmatprep.subr.bf16.mxu0 0
    %280 = vmatpush1.bf16.msra.mxu0 0
    %281 = vmatprep.mubr.bf16.mxu0 0
    %282 = vmatmul.mubr.bf16.gmra.mrb[0].mxu0 %v238
    %v283 = vpop.f32.mrb[0].mxu0
    %v284 = vadd.f32 0.0, %v283
    %v285 = vpop.f32.mrb[0].mxu0
    %v286 = vpop.f32.mrb[0].mxu0
    %v287 = vadd.f32 0.0, %v286
    %v288 = vpop.f32.mrb[0].mxu0
    %289 = vmatprep.mubr.bf16.mxu0 0
    %290 = vmatmul.mubr.bf16.gmra.mrb[0].mxu0 %v241
    %v291 = vpop.f32.mrb[0].mxu0
    %v292 = vadd.f32 0.0, %v291
    %v293 = vpop.f32.mrb[0].mxu0
    %v294 = vpop.f32.mrb[0].mxu0
    %v295 = vadd.f32 0.0, %v294
    %v296 = vpop.f32.mrb[0].mxu0
    %297 = vmatprep.mubr.bf16.mxu0 0
    %298 = vmatmul.mubr.bf16.gmra.mrb[0].mxu0 %v244
    %v299 = vpop.f32.mrb[0].mxu0
    %v300 = vadd.f32 0.0, %v299
    %v301 = vpop.f32.mrb[0].mxu0
    %v302 = vpop.f32.mrb[0].mxu0
    %v303 = vadd.f32 0.0, %v302
    %v304 = vpop.f32.mrb[0].mxu0
    %305 = vmatprep.mubr.bf16.mxu0 0
    %306 = vmatmul.mubr.bf16.gmra.mrb[0].mxu0 %v247
    %v307 = vpop.f32.mrb[0].mxu0
    %v308 = vadd.f32 0.0, %v307
    %v309 = vpop.f32.mrb[0].mxu0
    %v310 = vpop.f32.mrb[0].mxu0
    %v311 = vadd.f32 0.0, %v310
    %v312 = vpop.f32.mrb[0].mxu0
    %313 = vdwg.mxu0
    %v322 = vunpack.c.l.b16 %v25
    %v323 = vunpack.c.l.b16 %v26
    %v324 = vunpack.c.l.b16 %v27
    %v325 = vunpack.c.l.b16 %v28
    %v326 = vunpack.c.l.b16 %v29
    %v327 = vunpack.c.l.b16 %v30
    %v328 = vunpack.c.l.b16 %v31
    %v329 = vunpack.c.l.b16 %v32
    %v330 = vpack.c.b16 %v323, %v322
    %v331 = vpack.c.b16 %v325, %v324
    %v332 = vpack.c.b16 %v327, %v326
    %v333 = vpack.c.b16 %v329, %v328
    %v335 = vsel %vm236, %v330, 0
    %v338 = vsel %vm236, %v331, 0
    %v341 = vsel %vm236, %v332, 0
    %v344 = vsel %vm236, %v333, 0
    %346 = vmatprep.subr.bf16.mxu0 0
    %347 = vmatpush1.bf16.msra.mxu0 %v123
    %348 = vmatprep.subr.bf16.mxu0 0
    %349 = vmatpush1.bf16.msra.mxu0 %v124
    %350 = vmatprep.subr.bf16.mxu0 0
    %351 = vmatpush1.bf16.msra.mxu0 0
    %352 = vmatprep.subr.bf16.mxu0 0
    %353 = vmatpush1.bf16.msra.mxu0 0
    %354 = vmatprep.subr.bf16.mxu0 0
    %355 = vmatpush1.bf16.msra.mxu0 0
    %356 = vmatprep.subr.bf16.mxu0 0
    %357 = vmatpush1.bf16.msra.mxu0 0
    %358 = vmatprep.subr.bf16.mxu0 0
    %359 = vmatpush1.bf16.msra.mxu0 0
    %360 = vmatprep.subr.bf16.mxu0 0
    %361 = vmatpush1.bf16.msra.mxu0 0
    %362 = vmatprep.subr.bf16.mxu0 0
    %363 = vmatpush1.bf16.msra.mxu0 0
    %364 = vmatprep.subr.bf16.mxu0 0
    %365 = vmatpush1.bf16.msra.mxu0 0
    %366 = vmatprep.subr.bf16.mxu0 0
    %367 = vmatpush1.bf16.msra.mxu0 0
    %368 = vmatprep.subr.bf16.mxu0 0
    %369 = vmatpush1.bf16.msra.mxu0 0
    %370 = vmatprep.subr.bf16.mxu0 0
    %371 = vmatpush1.bf16.msra.mxu0 0
    %372 = vmatprep.subr.bf16.mxu0 0
    %373 = vmatpush1.bf16.msra.mxu0 0
    %374 = vmatprep.subr.bf16.mxu0 0
    %375 = vmatpush1.bf16.msra.mxu0 0
    %376 = vmatprep.subr.bf16.mxu0 0
    %377 = vmatpush1.bf16.msra.mxu0 0
    %378 = vmatprep.mubr.bf16.mxu0 0
    %379 = vmatmul.mubr.bf16.gmra.mrb[0].mxu0 %v335
    %v380 = vpop.f32.mrb[0].mxu0
    %v381 = vadd.f32 %v284, %v380
    %v382 = vpop.f32.mrb[0].mxu0
    %v383 = vpop.f32.mrb[0].mxu0
    %v384 = vadd.f32 %v287, %v383
    %v385 = vpop.f32.mrb[0].mxu0
    %386 = vmatprep.mubr.bf16.mxu0 0
    %387 = vmatmul.mubr.bf16.gmra.mrb[0].mxu0 %v338
    %v388 = vpop.f32.mrb[0].mxu0
    %v389 = vadd.f32 %v292, %v388
    %v390 = vpop.f32.mrb[0].mxu0
    %v391 = vpop.f32.mrb[0].mxu0
    %v392 = vadd.f32 %v295, %v391
    %v393 = vpop.f32.mrb[0].mxu0
    %394 = vmatprep.mubr.bf16.mxu0 0
    %395 = vmatmul.mubr.bf16.gmra.mrb[0].mxu0 %v341
    %v396 = vpop.f32.mrb[0].mxu0
    %v397 = vadd.f32 %v300, %v396
    %v398 = vpop.f32.mrb[0].mxu0
    %v399 = vpop.f32.mrb[0].mxu0
    %v400 = vadd.f32 %v303, %v399
    %v401 = vpop.f32.mrb[0].mxu0
    %402 = vmatprep.mubr.bf16.mxu0 0
    %403 = vmatmul.mubr.bf16.gmra.mrb[0].mxu0 %v344
    %v404 = vpop.f32.mrb[0].mxu0
    %v405 = vadd.f32 %v308, %v404
    %v406 = vpop.f32.mrb[0].mxu0
    %v407 = vpop.f32.mrb[0].mxu0
    %v408 = vadd.f32 %v311, %v407
    %v409 = vpop.f32.mrb[0].mxu0
    %410 = vdwg.mxu0
    %v411 = vld [vmem:[%s1 + $0x60] sm:$0xf]
    %v412 = vld [vmem:[%s1 + $0x64] sm:$0xf]
    %v413 = vld [vmem:[%s1 + $0x68] sm:$0xf]
    %v414 = vld [vmem:[%s1 + $0x6c] sm:$0xf]
    %v415 = vld [vmem:[%s1 + $0x70] sm:$0xf]
    %v416 = vld [vmem:[%s1 + $0x74] sm:$0xf]
    %v417 = vld [vmem:[%s1 + $0x78] sm:$0xf]
    %v418 = vld [vmem:[%s1 + $0x7c] sm:$0xf]
    %v419 = vld [vmem:[%s1 + $0xc0] sm:$0xf]
    %v420 = vld [vmem:[%s1 + $0xc4] sm:$0xf]
    %v421 = vld [vmem:[%s1 + $0xc8] sm:$0xf]
    %v422 = vld [vmem:[%s1 + $0xcc] sm:$0xf]
    %v423 = vld [vmem:[%s1 + $0xd0] sm:$0xf]
    %v424 = vld [vmem:[%s1 + $0xd4] sm:$0xf]
    %v425 = vld [vmem:[%s1 + $0xd8] sm:$0xf]
    %v426 = vld [vmem:[%s1 + $0xdc] sm:$0xf]
    %v435 = vunpack.c.l.b16 %v411
    %v436 = vunpack.c.l.b16 %v412
    %v437 = vunpack.c.l.b16 %v413
    %v438 = vunpack.c.l.b16 %v414
    %v439 = vunpack.c.l.b16 %v415
    %v440 = vunpack.c.l.b16 %v416
    %v441 = vunpack.c.l.b16 %v417
    %v442 = vunpack.c.l.b16 %v418
    %v443 = vpack.c.b16 %v436, %v435
    %v444 = vpack.c.b16 %v438, %v437
    %v445 = vpack.c.b16 %v440, %v439
    %v446 = vpack.c.b16 %v442, %v441
    %451 = vmatprep.subr.bf16.mxu0 0
    %452 = vmatpush1.bf16.msra.mxu0 %v443
    %453 = vmatprep.subr.bf16.mxu0 0
    %454 = vmatpush1.bf16.msra.mxu0 %v444
    %455 = vmatprep.subr.bf16.mxu0 0
    %456 = vmatpush1.bf16.msra.mxu0 %v445
    %457 = vmatprep.subr.bf16.mxu0 0
    %458 = vmatpush1.bf16.msra.mxu0 %v446
    %459 = vmatprep.subr.bf16.mxu0 0
    %460 = vmatpush1.bf16.msra.mxu0 0
    %461 = vmatprep.subr.bf16.mxu0 0
    %462 = vmatpush1.bf16.msra.mxu0 0
    %463 = vmatprep.subr.bf16.mxu0 0
    %464 = vmatpush1.bf16.msra.mxu0 0
    %465 = vmatprep.subr.bf16.mxu0 0
    %466 = vmatpush1.bf16.msra.mxu0 0
    %467 = vmatprep.subr.bf16.mxu0 0
    %468 = vmatpush1.bf16.msra.mxu0 0
    %469 = vmatprep.subr.bf16.mxu0 0
    %470 = vmatpush1.bf16.msra.mxu0 0
    %471 = vmatprep.subr.bf16.mxu0 0
    %472 = vmatpush1.bf16.msra.mxu0 0
    %473 = vmatprep.subr.bf16.mxu0 0
    %474 = vmatpush1.bf16.msra.mxu0 0
    %475 = vmatprep.subr.bf16.mxu0 0
    %476 = vmatpush1.bf16.msra.mxu0 0
    %477 = vmatprep.subr.bf16.mxu0 0
    %478 = vmatpush1.bf16.msra.mxu0 0
    %479 = vmatprep.subr.bf16.mxu0 0
    %480 = vmatpush1.bf16.msra.mxu0 0
    %481 = vmatprep.subr.bf16.mxu0 0
    %482 = vmatpush1.bf16.msra.mxu0 0
    %483 = vmatprep.mubr.bf16.mxu0 0
    %484 = vmatmul.mubr.bf16.gmra.mrb[0].mxu0 %v69
    %v485 = vpop.f32.mrb[0].mxu0
    %v486 = vadd.f32 0.0, %v485
    %v487 = vpop.f32.mrb[0].mxu0
    %v488 = vpop.f32.mrb[0].mxu0
    %v489 = vadd.f32 0.0, %v488
    %v490 = vpop.f32.mrb[0].mxu0
    %491 = vmatprep.mubr.bf16.mxu0 0
    %492 = vmatmul.mubr.bf16.gmra.mrb[0].mxu0 %v72
    %v493 = vpop.f32.mrb[0].mxu0
    %v494 = vadd.f32 0.0, %v493
    %v495 = vpop.f32.mrb[0].mxu0
    %v496 = vpop.f32.mrb[0].mxu0
    %v497 = vadd.f32 0.0, %v496
    %v498 = vpop.f32.mrb[0].mxu0
    %499 = vdwg.mxu0
    %v500 = vpack.c.bf16 %v489, %v486
    %v501 = vpack.c.bf16 %v497, %v494
    %v510 = vunpack.c.l.b16 %v419
    %v511 = vunpack.c.l.b16 %v420
    %v512 = vunpack.c.l.b16 %v421
    %v513 = vunpack.c.l.b16 %v422
    %v514 = vunpack.c.l.b16 %v423
    %v515 = vunpack.c.l.b16 %v424
    %v516 = vunpack.c.l.b16 %v425
    %v517 = vunpack.c.l.b16 %v426
    %v518 = vpack.c.b16 %v511, %v510
    %v519 = vpack.c.b16 %v513, %v512
    %v520 = vpack.c.b16 %v515, %v514
    %v521 = vpack.c.b16 %v517, %v516
    %v523 = vsel %vm236, %v518, 0
    %v526 = vsel %vm236, %v519, 0
    %v529 = vsel %vm236, %v520, 0
    %v532 = vsel %vm236, %v521, 0
    %534 = vmatprep.subr.bf16.mxu0 0
    %535 = vmatpush1.bf16.msra.mxu0 %v500
    %536 = vmatprep.subr.bf16.mxu0 0
    %537 = vmatpush1.bf16.msra.mxu0 %v501
    %538 = vmatprep.subr.bf16.mxu0 0
    %539 = vmatpush1.bf16.msra.mxu0 0
    %540 = vmatprep.subr.bf16.mxu0 0
    %541 = vmatpush1.bf16.msra.mxu0 0
    %542 = vmatprep.subr.bf16.mxu0 0
    %543 = vmatpush1.bf16.msra.mxu0 0
    %544 = vmatprep.subr.bf16.mxu0 0
    %545 = vmatpush1.bf16.msra.mxu0 0
    %546 = vmatprep.subr.bf16.mxu0 0
    %547 = vmatpush1.bf16.msra.mxu0 0
    %548 = vmatprep.subr.bf16.mxu0 0
    %549 = vmatpush1.bf16.msra.mxu0 0
    %550 = vmatprep.subr.bf16.mxu0 0
    %551 = vmatpush1.bf16.msra.mxu0 0
    %552 = vmatprep.subr.bf16.mxu0 0
    %553 = vmatpush1.bf16.msra.mxu0 0
    %554 = vmatprep.subr.bf16.mxu0 0
    %555 = vmatpush1.bf16.msra.mxu0 0
    %556 = vmatprep.subr.bf16.mxu0 0
    %557 = vmatpush1.bf16.msra.mxu0 0
    %558 = vmatprep.subr.bf16.mxu0 0
    %559 = vmatpush1.bf16.msra.mxu0 0
    %560 = vmatprep.subr.bf16.mxu0 0
    %561 = vmatpush1.bf16.msra.mxu0 0
    %562 = vmatprep.subr.bf16.mxu0 0
    %563 = vmatpush1.bf16.msra.mxu0 0
    %564 = vmatprep.subr.bf16.mxu0 0
    %565 = vmatpush1.bf16.msra.mxu0 0
    %566 = vmatprep.mubr.bf16.mxu0 0
    %567 = vmatmul.mubr.bf16.gmra.mrb[0].mxu0 %v523
    %v568 = vpop.f32.mrb[0].mxu0
    %v569 = vadd.f32 0.0, %v568
    %v570 = vpop.f32.mrb[0].mxu0
    %v571 = vpop.f32.mrb[0].mxu0
    %v572 = vadd.f32 0.0, %v571
    %v573 = vpop.f32.mrb[0].mxu0
    %574 = vmatprep.mubr.bf16.mxu0 0
    %575 = vmatmul.mubr.bf16.gmra.mrb[0].mxu0 %v526
    %v576 = vpop.f32.mrb[0].mxu0
    %v577 = vadd.f32 0.0, %v576
    %v578 = vpop.f32.mrb[0].mxu0
    %v579 = vpop.f32.mrb[0].mxu0
    %v580 = vadd.f32 0.0, %v579
    %v581 = vpop.f32.mrb[0].mxu0
    %582 = vmatprep.mubr.bf16.mxu0 0
    %583 = vmatmul.mubr.bf16.gmra.mrb[0].mxu0 %v529
    %v584 = vpop.f32.mrb[0].mxu0
    %v585 = vadd.f32 0.0, %v584
    %v586 = vpop.f32.mrb[0].mxu0
    %v587 = vpop.f32.mrb[0].mxu0
    %v588 = vadd.f32 0.0, %v587
    %v589 = vpop.f32.mrb[0].mxu0
    %590 = vmatprep.mubr.bf16.mxu0 0
    %591 = vmatmul.mubr.bf16.gmra.mrb[0].mxu0 %v532
    %v592 = vpop.f32.mrb[0].mxu0
    %v593 = vadd.f32 0.0, %v592
    %v594 = vpop.f32.mrb[0].mxu0
    %v595 = vpop.f32.mrb[0].mxu0
    %v596 = vadd.f32 0.0, %v595
    %v597 = vpop.f32.mrb[0].mxu0
    %598 = vdwg.mxu0
    %v599 = vadd.f32 %v381, %v569
    %v600 = vadd.f32 %v384, %v572
    %v601 = vadd.f32 %v389, %v577
    %v602 = vadd.f32 %v392, %v580
    %v603 = vadd.f32 %v397, %v585
    %v604 = vadd.f32 %v400, %v588
    %v605 = vadd.f32 %v405, %v593
    %v606 = vadd.f32 %v408, %v596
    %v607 = vld [vmem:[%s1 + $0xe8] sm:$0x1]
    %v608 = vunpack.c.l.bf16 %v607
    %v609 = vlaneseq
    %v610 = vshrl.u32 %v609, 7
    %v611 = vsub.s32 0, %v610
    %v612 = vrot.slane %v608, %v611
    %v613 = vadd.f32 %v599, %v612
    %v614 = vadd.f32 %v600, %v612
    %v615 = vadd.f32 %v601, %v612
    %v616 = vadd.f32 %v602, %v612
    %v617 = vadd.f32 %v603, %v612
    %v618 = vadd.f32 %v604, %v612
    %v619 = vadd.f32 %v605, %v612
    %v620 = vadd.f32 %v606, %v612
    %v621 = vmax.f32 %v613, 0.0
    %v622 = vmax.f32 %v614, 0.0
    %v623 = vmax.f32 %v615, 0.0
    %v624 = vmax.f32 %v616, 0.0
    %v625 = vmax.f32 %v617, 0.0
    %v626 = vmax.f32 %v618, 0.0
    %v627 = vmax.f32 %v619, 0.0
    %v628 = vmax.f32 %v620, 0.0
    %v629 = vld [vmem:[%s1] sm:$0xf]
    %v630 = vld [vmem:[%s1 + $0x4] sm:$0xf]
    %v631 = vld [vmem:[%s1 + $0x8] sm:$0xf]
    %v632 = vld [vmem:[%s1 + $0xc] sm:$0xf]
    %v633 = vld [vmem:[%s1 + $0x10] sm:$0xf]
    %v634 = vld [vmem:[%s1 + $0x14] sm:$0xf]
    %v635 = vld [vmem:[%s1 + $0x18] sm:$0xf]
    %v636 = vld [vmem:[%s1 + $0x1c] sm:$0xf]
    %v637 = vld [vmem:[%s1 + $0xe0] sm:$0x1]
    %v638 = vunpack.c.l.bf16 %v637
    %v639 = vpack.c.bf16 %v622, %v621
    %v640 = vpack.c.bf16 %v624, %v623
    %v641 = vpack.c.bf16 %v626, %v625
    %v642 = vpack.c.bf16 %v628, %v627
    %v643 = vlaneseq
    %v644 = vshrl.u32 %v643, 7
    %v645 = vsub.s32 0, %v644
    %v646 = vrot.slane %v638, %v645
    %v655 = vunpack.c.l.b16 %v629
    %v656 = vunpack.c.l.b16 %v630
    %v657 = vunpack.c.l.b16 %v631
    %v658 = vunpack.c.l.b16 %v632
    %v659 = vunpack.c.l.b16 %v633
    %v660 = vunpack.c.l.b16 %v634
    %v661 = vunpack.c.l.b16 %v635
    %v662 = vunpack.c.l.b16 %v636
    %v663 = vpack.c.b16 %v656, %v655
    %v664 = vpack.c.b16 %v658, %v657
    %v665 = vpack.c.b16 %v660, %v659
    %v666 = vpack.c.b16 %v662, %v661
    %v672 = vsel %vm67, %v639, 0
    %v675 = vsel %vm67, %v640, 0
    %v678 = vsel %vm67, %v641, 0
    %v681 = vsel %vm67, %v642, 0
    %683 = vmatprep.subr.bf16.mxu0 0
    %684 = vmatpush1.bf16.msra.mxu0 %v663
    %685 = vmatprep.subr.bf16.mxu0 0
    %686 = vmatpush1.bf16.msra.mxu0 %v664
    %687 = vmatprep.subr.bf16.mxu0 0
    %688 = vmatpush1.bf16.msra.mxu0 %v665
    %689 = vmatprep.subr.bf16.mxu0 0
    %690 = vmatpush1.bf16.msra.mxu0 %v666
    %691 = vmatprep.subr.bf16.mxu0 0
    %692 = vmatpush1.bf16.msra.mxu0 0
    %693 = vmatprep.subr.bf16.mxu0 0
    %694 = vmatpush1.bf16.msra.mxu0 0
    %695 = vmatprep.subr.bf16.mxu0 0
    %696 = vmatpush1.bf16.msra.mxu0 0
    %697 = vmatprep.subr.bf16.mxu0 0
    %698 = vmatpush1.bf16.msra.mxu0 0
    %699 = vmatprep.subr.bf16.mxu0 0
    %700 = vmatpush1.bf16.msra.mxu0 0
    %701 = vmatprep.subr.bf16.mxu0 0
    %702 = vmatpush1.bf16.msra.mxu0 0
    %703 = vmatprep.subr.bf16.mxu0 0
    %704 = vmatpush1.bf16.msra.mxu0 0
    %705 = vmatprep.subr.bf16.mxu0 0
    %706 = vmatpush1.bf16.msra.mxu0 0
    %707 = vmatprep.subr.bf16.mxu0 0
    %708 = vmatpush1.bf16.msra.mxu0 0
    %709 = vmatprep.subr.bf16.mxu0 0
    %710 = vmatpush1.bf16.msra.mxu0 0
    %711 = vmatprep.subr.bf16.mxu0 0
    %712 = vmatpush1.bf16.msra.mxu0 0
    %713 = vmatprep.subr.bf16.mxu0 0
    %714 = vmatpush1.bf16.msra.mxu0 0
    %715 = vmatprep.mubr.bf16.mxu0 0
    %716 = vmatmul.mubr.bf16.gmra.mrb[0].mxu0 %v672
    %v717 = vpop.f32.mrb[0].mxu0
    %v718 = vadd.f32 %v646, %v717
    %v719 = vpop.f32.mrb[0].mxu0
    %v720 = vpop.f32.mrb[0].mxu0
    %v721 = vadd.f32 %v646, %v720
    %v722 = vpop.f32.mrb[0].mxu0
    %723 = vmatprep.mubr.bf16.mxu0 0
    %724 = vmatmul.mubr.bf16.gmra.mrb[0].mxu0 %v675
    %v725 = vpop.f32.mrb[0].mxu0
    %v726 = vadd.f32 %v646, %v725
    %v727 = vpop.f32.mrb[0].mxu0
    %v728 = vpop.f32.mrb[0].mxu0
    %v729 = vadd.f32 %v646, %v728
    %v730 = vpop.f32.mrb[0].mxu0
    %731 = vmatprep.mubr.bf16.mxu0 0
    %732 = vmatmul.mubr.bf16.gmra.mrb[0].mxu0 %v678
    %v733 = vpop.f32.mrb[0].mxu0
    %v734 = vadd.f32 %v646, %v733
    %v735 = vpop.f32.mrb[0].mxu0
    %v736 = vpop.f32.mrb[0].mxu0
    %v737 = vadd.f32 %v646, %v736
    %v738 = vpop.f32.mrb[0].mxu0
    %739 = vmatprep.mubr.bf16.mxu0 0
    %740 = vmatmul.mubr.bf16.gmra.mrb[0].mxu0 %v681
    %v741 = vpop.f32.mrb[0].mxu0
    %v742 = vadd.f32 %v646, %v741
    %v743 = vpop.f32.mrb[0].mxu0
    %v744 = vpop.f32.mrb[0].mxu0
    %v745 = vadd.f32 %v646, %v744
    %v746 = vpop.f32.mrb[0].mxu0
    %747 = vdwg.mxu0
    %748 = vst [vmem:[#allocation2] sm:$0xff] %v718
    %749 = vst [vmem:[#allocation2 + $0x8] sm:$0xff] %v721
    %750 = vst [vmem:[#allocation2 + $0x10] sm:$0xff] %v726
    %751 = vst [vmem:[#allocation2 + $0x18] sm:$0xff] %v729
    %752 = vst [vmem:[#allocation2 + $0x20] sm:$0xff] %v734
    %753 = vst [vmem:[#allocation2 + $0x28] sm:$0xff] %v737
    %754 = vst [vmem:[#allocation2 + $0x30] sm:$0xff] %v742
    %755 = vst [vmem:[#allocation2 + $0x38] sm:$0xff] %v745
    // Predicated region
    $region10: #{forward.1} parent=1 // pred_check
      _
    $region11: #{forward.1} parent=1 // pred_check_branch
      %757 = sbr.rel (0) target = $region13
    $region12: #{forward.1} parent=1 // pred_region
      %s759 = ssub.s32 1024, 1024
      %760 = vsyncadd [#allocation3], %s759
      %s761 = sshll.u32 [#allocation2], 4
      %s762 = int_to_ptr.vmem [resolvable:$true] %s761
      %767 = dma.vmem_to_hbm [thread:$0]  %s762, 1024, %s2, [#allocation3], 128, 128, 8
    $region13: #{forward.1} parent=1 // pred_fallthru
      _
    // Predicated region
    $region14: #{forward.1} parent=1 // pred_check
      _
    $region15: #{forward.1} parent=1 // pred_check_branch
      %769 = sbr.rel (0) target = $region17
    $region16: #{forward.1} parent=1 // pred_region
      %770 = dma.done [#allocation3], 1024
    $region17: #{forward.1} parent=1 // pred_fallthru
      _
    %771 = vsyncpa [#allocation3], 1

</llo_original>
